<compile_context>
chip_gen: v7x
topology: tpu7x:2x2x1
jax: 0.10.0
libtpu: 0.0.40
codegen_flags: <defaults>
</compile_context>

<pallas_src>
import jax
import jax.numpy as jnp
from jax import lax
from jax.experimental import pallas as pl
from jax.experimental.pallas import tpu as pltpu


def _round_up(x, m):
    return ((x + m - 1) // m) * m


def _sparse_pool_kernel(vals_ref, bagb_ref, bagf_ref, tables_ref, out_ref, acc_ref):
    """One grid step = (one B tile) x (one N tile), all F features fused.

    vals_ref:   (1, T) int32   embedding ids per jagged position (-1 = pad)
    bagb_ref:   (1, T) int32   batch index of each position       (-1 = pad)
    bagf_ref:   (1, T) int32   feature index of each position     (-1 = pad)
    tables_ref: (F, tile_n, D) float32 slice of the stacked tables
    out_ref:    (tile_b, F, D) pooled output block (final layout)
    acc_ref:    (F, tile_b, D) float32 VMEM accumulator (resident across N tiles)
    """
    bt = pl.program_id(0)          # B-tile index ("parallel")
    nt = pl.program_id(1)          # N-tile index (reduction, "arbitrary")

    F, tile_n, D = tables_ref.shape
    tile_b = out_ref.shape[0]
    T = vals_ref.shape[1]

    @pl.when(nt == 0)
    def _():
        acc_ref[...] = jnp.zeros_like(acc_ref)

    vals = vals_ref[...]           # (1, T)
    bagb = bagb_ref[...]           # (1, T)
    bagf = bagf_ref[...]           # (1, T)

    # One-hot of ids restricted to the current N tile, id-major: (tile_n, T).
    n_iota = lax.broadcasted_iota(jnp.int32, (tile_n, T), 0) + nt * tile_n
    sel_nT = (n_iota == vals).astype(jnp.float32)            # exact 0/1

    # Batch-row selector for this B tile: (tile_b, T).
    b_iota = lax.broadcasted_iota(jnp.int32, (tile_b, T), 0) + bt * tile_b
    sel_b = b_iota == bagb

    # Contract the jagged-position axis T of both operands (A @ B.T on MXU).
    contract_t = (((1,), (1,)), ((), ()))

    for f in range(F):  # F is small & static -> unrolled at trace time
        sel_bf = jnp.where(jnp.logical_and(sel_b, bagf == f), 1.0, 0.0)  # (tile_b, T)
        # counts[b, n] = #occurrences of id (nt*tile_n + n) in bag (f, b)
        counts = lax.dot_general(sel_bf, sel_nT, contract_t,
                                 preferred_element_type=jnp.float32)     # (tile_b, tile_n)
        # SUM pooling (exact, incl. repeated ids) as counts @ table_tile.
        acc_ref[f] += jnp.dot(counts, tables_ref[f],
                              preferred_element_type=jnp.float32)        # (tile_b, D)

    @pl.when(nt == pl.num_programs(1) - 1)
    def _():
        for f in range(F):
            out_ref[:, f, :] = acc_ref[f].astype(out_ref.dtype)


def sparse_arch_forward(values, offsets, tables, batch_size, *,
                        tile_n=None, tile_b=None):
    """values:  (T_pad,) int32 padded KJT values (entries past offsets[-1] ignored)
       offsets: (F*B + 1,) int32 KJT offsets (key-major, then batch)
       tables:  (F, N, D) float32 embedding tables (one per feature)
       returns: (B, F, D) float32 pooled sparse embeddings
    """
    F, N, D = tables.shape
    B = batch_size
    T_pad = values.shape[0]

    # ---- O(T) metadata only: lengths -> segment ids (no scatter, no searchsorted,
    # ---- no dense (F, B, N) tensor in HBM) --------------------------------------
    lengths = (offsets[1:] - offsets[:-1]).astype(jnp.int32)
    total = offsets[-1].astype(jnp.int32)
    seg = jnp.repeat(jnp.arange(F * B, dtype=jnp.int32), lengths,
                     total_repeat_length=T_pad)
    pos = jnp.arange(T_pad, dtype=jnp.int32)
    valid = pos < total
    bag_f = jnp.where(valid, seg // B, -1).astype(jnp.int32)
    bag_b = jnp.where(valid, seg % B, -1).astype(jnp.int32)
    vals = jnp.where(valid, values.astype(jnp.int32), -1)

    # ---- tiling ------------------------------------------------------------------
    if tile_b is None:
        tile_b = B
    tile_b = _round_up(min(tile_b, B), 8)
    B_pad = _round_up(B, tile_b)

    if tile_n is None:
        tile_n = min(N, 2048)          # bound double-buffered VMEM for large N
    tile_n = _round_up(min(tile_n, N), 8)
    N_pad = _round_up(N, tile_n)
    tbl = tables if N_pad == N else jnp.pad(tables, ((0, 0), (0, N_pad - N), (0, 0)))

    grid = (B_pad // tile_b, N_pad // tile_n)

    out = pl.pallas_call(
        _sparse_pool_kernel,
        out_shape=jax.ShapeDtypeStruct((B_pad, F, D), tables.dtype),
        grid=grid,
        in_specs=[
            pl.BlockSpec((1, T_pad), lambda bt, nt: (0, 0)),          # ids
            pl.BlockSpec((1, T_pad), lambda bt, nt: (0, 0)),          # bag batch
            pl.BlockSpec((1, T_pad), lambda bt, nt: (0, 0)),          # bag feature
            pl.BlockSpec((F, tile_n, D), lambda bt, nt: (0, nt, 0)),  # table K-tile
        ],
        out_specs=pl.BlockSpec((tile_b, F, D), lambda bt, nt: (bt, 0, 0)),
        scratch_shapes=[pltpu.VMEM((F, tile_b, D), jnp.float32)],
        compiler_params=pltpu.CompilerParams(
            dimension_semantics=("parallel", "arbitrary")),
    )(vals.reshape(1, T_pad), bag_b.reshape(1, T_pad), bag_f.reshape(1, T_pad), tbl)

    return out[:B]                     # (B, F, D), already in final layout


def _reference(values, offsets, tables, B):
    """Pure numpy reference (sum-pooled embedding bags)."""
    import numpy as np
    values = np.asarray(jax.device_get(values))
    offsets = np.asarray(jax.device_get(offsets))
    tables = np.asarray(jax.device_get(tables))
    F, N, D = tables.shape
    ref = np.zeros((B, F, D), np.float32)
    for f in range(F):
        for b in range(B):
            s, e = int(offsets[f * B + b]), int(offsets[f * B + b + 1])
            for v in values[s:e]:
                ref[b, f] += tables[f, int(v)]
    return jnp.asarray(ref)


if __name__ == "__main__":
    # Small, DLRM-consistent shapes: F tables, N rows each, dim D, batch B.
    F, N, D, B = 4, 64, 16, 8
    MAX_BAG = 4
    T_PAD = F * B * MAX_BAG            # static padded length of the value list

    key = jax.random.PRNGKey(0)
    k_tab, k_len, k_val = jax.random.split(key, 3)

    # Deterministic "parameters": one (N, D) embedding table per feature.
    tables = jax.random.normal(k_tab, (F, N, D), jnp.float32) * 0.1

    # Deterministic KeyedJaggedTensor-style inputs (values padded to T_PAD;
    # entries past offsets[-1] are ignored by the kernel).
    lengths = jax.random.randint(k_len, (F * B,), 0, MAX_BAG + 1, jnp.int32)
    offsets = jnp.concatenate(
        [jnp.zeros((1,), jnp.int32), jnp.cumsum(lengths)]).astype(jnp.int32)
    values = jax.random.randint(k_val, (T_PAD,), 0, N, jnp.int32)

    fwd = jax.jit(sparse_arch_forward,
                  static_argnames=("batch_size", "tile_n", "tile_b"))

    ref = _reference(values, offsets, tables, B)

    # Single N tile (whole problem in one grid step).
    out1 = jax.block_until_ready(fwd(values, offsets, tables, batch_size=B))
    # K-tiled reduction over N (exercises the accumulator / pl.when path).
    out2 = jax.block_until_ready(
        fwd(values, offsets, tables, batch_size=B, tile_n=32))

    assert out1.shape == (B, F, D), out1.shape
    assert out2.shape == (B, F, D), out2.shape
    assert jnp.allclose(out1, ref, atol=1e-5, rtol=1e-5), "mismatch (single tile)"
    assert jnp.allclose(out2, ref, atol=1e-5, rtol=1e-5), "mismatch (N-tiled)"

    print("KERNEL_OK")
</pallas_src>

<mosaic_0001>
module attributes {stable_mosaic.version = 11 : i64} {
  func.func private @main(%arg0: i32) attributes {dimension_semantics = [#tpu.dimension_semantics<core_parallel>], iteration_bounds = array<i64: 2>, tpu.core_type = #tpu.core_type<sc_scalar_subcore>, window_params = []} {
    return
  }
}

module attributes {stable_mosaic.version = 11 : i64} {
  func.func private @main(%arg0: i32) attributes {dimension_semantics = [#tpu.dimension_semantics<core_parallel>], iteration_bounds = array<i64: 2>, tpu.core_type = #tpu.core_type<sc_scalar_subcore>, window_params = []} {
    return
  }
}

module attributes {stable_mosaic.version = 11 : i64} {
  func.func @_sparse_pool_kernel(%arg0: i32, %arg1: i32, %arg2: memref<1x128xi32, #tpu.memory_space<vmem>>, %arg3: memref<1x128xi32, #tpu.memory_space<vmem>>, %arg4: memref<1x128xi32, #tpu.memory_space<vmem>>, %arg5: memref<4x64x16xf32, #tpu.memory_space<vmem>>, %arg6: memref<8x4x16xf32, #tpu.memory_space<vmem>>, %arg7: memref<4x8x16xf32, #tpu.memory_space<vmem>>) attributes {dimension_semantics = [#tpu.dimension_semantics<parallel>, #tpu.dimension_semantics<arbitrary>], iteration_bounds = array<i64: 1, 1>, scalar_prefetch = 0 : i64, scratch_operands = 1 : i64, tpu.core_type = #tpu.core_type<tc>, window_params = [{pipeline_mode = #tpu.pipeline_mode<synchronous>, transform_indices = @transform_0, window_bounds = array<i64: 1, 128>}, {pipeline_mode = #tpu.pipeline_mode<synchronous>, transform_indices = @transform_1, window_bounds = array<i64: 1, 128>}, {pipeline_mode = #tpu.pipeline_mode<synchronous>, transform_indices = @transform_2, window_bounds = array<i64: 1, 128>}, {transform_indices = @transform_3, window_bounds = array<i64: 4, 64, 16>}, {transform_indices = @transform_4, window_bounds = array<i64: 8, 4, 16>}]} {
    %c0_i32 = arith.constant 0 : i32
    %0 = arith.cmpi eq, %arg1, %c0_i32 : i32
    %1 = arith.extui %0 : i1 to i32
    %c0_i32_0 = arith.constant 0 : i32
    %2 = arith.cmpi ne, %1, %c0_i32_0 : i32
    scf.if %2 {
      %cst_57 = arith.constant 0.000000e+00 : f32
      %91 = vector.broadcast %cst_57 : f32 to vector<4x8x16xf32>
      %c0_58 = arith.constant 0 : index
      %c0_59 = arith.constant 0 : index
      %c0_60 = arith.constant 0 : index
      %92 = vector.load %arg7[%c0_58, %c0_59, %c0_60] : memref<4x8x16xf32, #tpu.memory_space<vmem>>, vector<4x8x16xf32>
      tpu.vector_store %arg7[%c0_58, %c0_59, %c0_60], %91 {strides = array<i32>} : memref<4x8x16xf32, #tpu.memory_space<vmem>>, vector<4x8x16xf32>,
    } else {
    }
    %c0 = arith.constant 0 : index
    %c0_1 = arith.constant 0 : index
    %3 = vector.load %arg2[%c0, %c0_1] : memref<1x128xi32, #tpu.memory_space<vmem>>, vector<1x128xi32>
    %c0_2 = arith.constant 0 : index
    %c0_3 = arith.constant 0 : index
    %4 = vector.load %arg3[%c0_2, %c0_3] : memref<1x128xi32, #tpu.memory_space<vmem>>, vector<1x128xi32>
    %c0_4 = arith.constant 0 : index
    %c0_5 = arith.constant 0 : index
    %5 = vector.load %arg4[%c0_4, %c0_5] : memref<1x128xi32, #tpu.memory_space<vmem>>, vector<1x128xi32>
    %6 = tpu.iota {dimensions = array<i32: 0>} : vector<64x128xi32>
    %c64_i32 = arith.constant 64 : i32
    %7 = arith.muli %arg1, %c64_i32 : i32
    %8 = vector.broadcast %7 : i32 to vector<64x128xi32>
    %9 = arith.addi %6, %8 : vector<64x128xi32>
    %10 = vector.broadcast %3 : vector<1x128xi32> to vector<64x128xi32>
    %11 = arith.cmpi eq, %9, %10 : vector<64x128xi32>
    %12 = arith.extui %11 : vector<64x128xi1> to vector<64x128xi32>
    %13 = arith.sitofp %12 : vector<64x128xi32> to vector<64x128xf32>
    %14 = tpu.iota {dimensions = array<i32: 0>} : vector<8x128xi32>
    %c8_i32 = arith.constant 8 : i32
    %15 = arith.muli %arg0, %c8_i32 : i32
    %16 = vector.broadcast %15 : i32 to vector<8x128xi32>
    %17 = arith.addi %14, %16 : vector<8x128xi32>
    %18 = vector.broadcast %4 : vector<1x128xi32> to vector<8x128xi32>
    %19 = arith.cmpi eq, %17, %18 : vector<8x128xi32>
    %c0_i32_6 = arith.constant 0 : i32
    %20 = vector.broadcast %c0_i32_6 : i32 to vector<1x128xi32>
    %21 = arith.cmpi eq, %5, %20 : vector<1x128xi32>
    %22 = vector.broadcast %21 : vector<1x128xi1> to vector<8x128xi1>
    %23 = arith.andi %19, %22 : vector<8x128xi1>
    %cst = arith.constant 1.000000e+00 : f32
    %cst_7 = arith.constant 0.000000e+00 : f32
    %24 = vector.broadcast %cst : f32 to vector<8x128xf32>
    %25 = vector.broadcast %cst_7 : f32 to vector<8x128xf32>
    %26 = arith.select %23, %24, %25 : vector<8x128xi1>, vector<8x128xf32>
    %cst_8 = arith.constant dense<0.000000e+00> : vector<8x64xf32>
    %27 = tpu.matmul %26, %13, %cst_8 {dimension_numbers = #tpu.dot_dimension_numbers<[1], [1], [0], [0], [0, 0, 1, 0], [], []>} : vector<8x128xf32>, vector<64x128xf32>, vector<8x64xf32> -> vector<8x64xf32>
    %c0_9 = arith.constant 0 : index
    %c0_10 = arith.constant 0 : index
    %c0_11 = arith.constant 0 : index
    %28 = vector.load %arg7[%c0_9, %c0_10, %c0_11] : memref<4x8x16xf32, #tpu.memory_space<vmem>>, vector<1x8x16xf32>
    %29 = vector.shape_cast %28 : vector<1x8x16xf32> to vector<8x16xf32>
    %c0_12 = arith.constant 0 : index
    %c0_13 = arith.constant 0 : index
    %c0_14 = arith.constant 0 : index
    %30 = vector.load %arg5[%c0_12, %c0_13, %c0_14] : memref<4x64x16xf32, #tpu.memory_space<vmem>>, vector<1x64x16xf32>
    %31 = vector.shape_cast %30 : vector<1x64x16xf32> to vector<64x16xf32>
    %cst_15 = arith.constant dense<0.000000e+00> : vector<8x16xf32>
    %32 = tpu.matmul %27, %31, %cst_15 {dimension_numbers = #tpu.dot_dimension_numbers<[1], [0], [0], [1], [0, 0, 1, 1], [], []>} : vector<8x64xf32>, vector<64x16xf32>, vector<8x16xf32> -> vector<8x16xf32>
    %33 = arith.addf %29, %32 : vector<8x16xf32>
    %c0_16 = arith.constant 0 : index
    %c0_17 = arith.constant 0 : index
    %c0_18 = arith.constant 0 : index
    %34 = vector.load %arg7[%c0_16, %c0_17, %c0_18] : memref<4x8x16xf32, #tpu.memory_space<vmem>>, vector<1x8x16xf32>
    %35 = vector.shape_cast %34 : vector<1x8x16xf32> to vector<8x16xf32>
    %36 = vector.shape_cast %33 : vector<8x16xf32> to vector<1x8x16xf32>
    tpu.vector_store %arg7[%c0_16, %c0_17, %c0_18], %36 {strides = array<i32>} : memref<4x8x16xf32, #tpu.memory_space<vmem>>, vector<1x8x16xf32>,
    %c1_i32 = arith.constant 1 : i32
    %37 = vector.broadcast %c1_i32 : i32 to vector<1x128xi32>
    %38 = arith.cmpi eq, %5, %37 : vector<1x128xi32>
    %39 = vector.broadcast %38 : vector<1x128xi1> to vector<8x128xi1>
    %40 = arith.andi %19, %39 : vector<8x128xi1>
    %cst_19 = arith.constant 1.000000e+00 : f32
    %cst_20 = arith.constant 0.000000e+00 : f32
    %41 = vector.broadcast %cst_19 : f32 to vector<8x128xf32>
    %42 = vector.broadcast %cst_20 : f32 to vector<8x128xf32>
    %43 = arith.select %40, %41, %42 : vector<8x128xi1>, vector<8x128xf32>
    %cst_21 = arith.constant dense<0.000000e+00> : vector<8x64xf32>
    %44 = tpu.matmul %43, %13, %cst_21 {dimension_numbers = #tpu.dot_dimension_numbers<[1], [1], [0], [0], [0, 0, 1, 0], [], []>} : vector<8x128xf32>, vector<64x128xf32>, vector<8x64xf32> -> vector<8x64xf32>
    %c1 = arith.constant 1 : index
    %c0_22 = arith.constant 0 : index
    %c0_23 = arith.constant 0 : index
    %45 = vector.load %arg7[%c1, %c0_22, %c0_23] : memref<4x8x16xf32, #tpu.memory_space<vmem>>, vector<1x8x16xf32>
    %46 = vector.shape_cast %45 : vector<1x8x16xf32> to vector<8x16xf32>
    %c1_24 = arith.constant 1 : index
    %c0_25 = arith.constant 0 : index
    %c0_26 = arith.constant 0 : index
    %47 = vector.load %arg5[%c1_24, %c0_25, %c0_26] : memref<4x64x16xf32, #tpu.memory_space<vmem>>, vector<1x64x16xf32>
    %48 = vector.shape_cast %47 : vector<1x64x16xf32> to vector<64x16xf32>
    %cst_27 = arith.constant dense<0.000000e+00> : vector<8x16xf32>
    %49 = tpu.matmul %44, %48, %cst_27 {dimension_numbers = #tpu.dot_dimension_numbers<[1], [0], [0], [1], [0, 0, 1, 1], [], []>} : vector<8x64xf32>, vector<64x16xf32>, vector<8x16xf32> -> vector<8x16xf32>
    %50 = arith.addf %46, %49 : vector<8x16xf32>
    %c1_28 = arith.constant 1 : index
    %c0_29 = arith.constant 0 : index
    %c0_30 = arith.constant 0 : index
    %51 = vector.load %arg7[%c1_28, %c0_29, %c0_30] : memref<4x8x16xf32, #tpu.memory_space<vmem>>, vector<1x8x16xf32>
    %52 = vector.shape_cast %51 : vector<1x8x16xf32> to vector<8x16xf32>
    %53 = vector.shape_cast %50 : vector<8x16xf32> to vector<1x8x16xf32>
    tpu.vector_store %arg7[%c1_28, %c0_29, %c0_30], %53 {strides = array<i32>} : memref<4x8x16xf32, #tpu.memory_space<vmem>>, vector<1x8x16xf32>,
    %c2_i32 = arith.constant 2 : i32
    %54 = vector.broadcast %c2_i32 : i32 to vector<1x128xi32>
    %55 = arith.cmpi eq, %5, %54 : vector<1x128xi32>
    %56 = vector.broadcast %55 : vector<1x128xi1> to vector<8x128xi1>
    %57 = arith.andi %19, %56 : vector<8x128xi1>
    %cst_31 = arith.constant 1.000000e+00 : f32
    %cst_32 = arith.constant 0.000000e+00 : f32
    %58 = vector.broadcast %cst_31 : f32 to vector<8x128xf32>
    %59 = vector.broadcast %cst_32 : f32 to vector<8x128xf32>
    %60 = arith.select %57, %58, %59 : vector<8x128xi1>, vector<8x128xf32>
    %cst_33 = arith.constant dense<0.000000e+00> : vector<8x64xf32>
    %61 = tpu.matmul %60, %13, %cst_33 {dimension_numbers = #tpu.dot_dimension_numbers<[1], [1], [0], [0], [0, 0, 1, 0], [], []>} : vector<8x128xf32>, vector<64x128xf32>, vector<8x64xf32> -> vector<8x64xf32>
    %c2 = arith.constant 2 : index
    %c0_34 = arith.constant 0 : index
    %c0_35 = arith.constant 0 : index
    %62 = vector.load %arg7[%c2, %c0_34, %c0_35] : memref<4x8x16xf32, #tpu.memory_space<vmem>>, vector<1x8x16xf32>
    %63 = vector.shape_cast %62 : vector<1x8x16xf32> to vector<8x16xf32>
    %c2_36 = arith.constant 2 : index
    %c0_37 = arith.constant 0 : index
    %c0_38 = arith.constant 0 : index
    %64 = vector.load %arg5[%c2_36, %c0_37, %c0_38] : memref<4x64x16xf32, #tpu.memory_space<vmem>>, vector<1x64x16xf32>
    %65 = vector.shape_cast %64 : vector<1x64x16xf32> to vector<64x16xf32>
    %cst_39 = arith.constant dense<0.000000e+00> : vector<8x16xf32>
    %66 = tpu.matmul %61, %65, %cst_39 {dimension_numbers = #tpu.dot_dimension_numbers<[1], [0], [0], [1], [0, 0, 1, 1], [], []>} : vector<8x64xf32>, vector<64x16xf32>, vector<8x16xf32> -> vector<8x16xf32>
    %67 = arith.addf %63, %66 : vector<8x16xf32>
    %c2_40 = arith.constant 2 : index
    %c0_41 = arith.constant 0 : index
    %c0_42 = arith.constant 0 : index
    %68 = vector.load %arg7[%c2_40, %c0_41, %c0_42] : memref<4x8x16xf32, #tpu.memory_space<vmem>>, vector<1x8x16xf32>
    %69 = vector.shape_cast %68 : vector<1x8x16xf32> to vector<8x16xf32>
    %70 = vector.shape_cast %67 : vector<8x16xf32> to vector<1x8x16xf32>
    tpu.vector_store %arg7[%c2_40, %c0_41, %c0_42], %70 {strides = array<i32>} : memref<4x8x16xf32, #tpu.memory_space<vmem>>, vector<1x8x16xf32>,
    %c3_i32 = arith.constant 3 : i32
    %71 = vector.broadcast %c3_i32 : i32 to vector<1x128xi32>
    %72 = arith.cmpi eq, %5, %71 : vector<1x128xi32>
    %73 = vector.broadcast %72 : vector<1x128xi1> to vector<8x128xi1>
    %74 = arith.andi %19, %73 : vector<8x128xi1>
    %cst_43 = arith.constant 1.000000e+00 : f32
    %cst_44 = arith.constant 0.000000e+00 : f32
    %75 = vector.broadcast %cst_43 : f32 to vector<8x128xf32>
    %76 = vector.broadcast %cst_44 : f32 to vector<8x128xf32>
    %77 = arith.select %74, %75, %76 : vector<8x128xi1>, vector<8x128xf32>
    %cst_45 = arith.constant dense<0.000000e+00> : vector<8x64xf32>
    %78 = tpu.matmul %77, %13, %cst_45 {dimension_numbers = #tpu.dot_dimension_numbers<[1], [1], [0], [0], [0, 0, 1, 0], [], []>} : vector<8x128xf32>, vector<64x128xf32>, vector<8x64xf32> -> vector<8x64xf32>
    %c3 = arith.constant 3 : index
    %c0_46 = arith.constant 0 : index
    %c0_47 = arith.constant 0 : index
    %79 = vector.load %arg7[%c3, %c0_46, %c0_47] : memref<4x8x16xf32, #tpu.memory_space<vmem>>, vector<1x8x16xf32>
    %80 = vector.shape_cast %79 : vector<1x8x16xf32> to vector<8x16xf32>
    %c3_48 = arith.constant 3 : index
    %c0_49 = arith.constant 0 : index
    %c0_50 = arith.constant 0 : index
    %81 = vector.load %arg5[%c3_48, %c0_49, %c0_50] : memref<4x64x16xf32, #tpu.memory_space<vmem>>, vector<1x64x16xf32>
    %82 = vector.shape_cast %81 : vector<1x64x16xf32> to vector<64x16xf32>
    %cst_51 = arith.constant dense<0.000000e+00> : vector<8x16xf32>
    %83 = tpu.matmul %78, %82, %cst_51 {dimension_numbers = #tpu.dot_dimension_numbers<[1], [0], [0], [1], [0, 0, 1, 1], [], []>} : vector<8x64xf32>, vector<64x16xf32>, vector<8x16xf32> -> vector<8x16xf32>
    %84 = arith.addf %80, %83 : vector<8x16xf32>
    %c3_52 = arith.constant 3 : index
    %c0_53 = arith.constant 0 : index
    %c0_54 = arith.constant 0 : index
    %85 = vector.load %arg7[%c3_52, %c0_53, %c0_54] : memref<4x8x16xf32, #tpu.memory_space<vmem>>, vector<1x8x16xf32>
    %86 = vector.shape_cast %85 : vector<1x8x16xf32> to vector<8x16xf32>
    %87 = vector.shape_cast %84 : vector<8x16xf32> to vector<1x8x16xf32>
    tpu.vector_store %arg7[%c3_52, %c0_53, %c0_54], %87 {strides = array<i32>} : memref<4x8x16xf32, #tpu.memory_space<vmem>>, vector<1x8x16xf32>,
    %c0_i32_55 = arith.constant 0 : i32
    %88 = arith.cmpi eq, %arg1, %c0_i32_55 : i32
    %89 = arith.extui %88 : i1 to i32
    %c0_i32_56 = arith.constant 0 : i32
    %90 = arith.cmpi ne, %89, %c0_i32_56 : i32
    scf.if %90 {
      %c0_57 = arith.constant 0 : index
      %c0_58 = arith.constant 0 : index
      %c0_59 = arith.constant 0 : index
      %91 = vector.load %arg7[%c0_57, %c0_58, %c0_59] : memref<4x8x16xf32, #tpu.memory_space<vmem>>, vector<1x8x16xf32>
      %92 = vector.shape_cast %91 : vector<1x8x16xf32> to vector<8x16xf32>
      %c0_60 = arith.constant 0 : index
      %c0_61 = arith.constant 0 : index
      %c0_62 = arith.constant 0 : index
      %93 = vector.load %arg6[%c0_60, %c0_61, %c0_62] : memref<8x4x16xf32, #tpu.memory_space<vmem>>, vector<8x1x16xf32>
      %94 = vector.shape_cast %93 : vector<8x1x16xf32> to vector<8x16xf32>
      %95 = vector.shape_cast %92 : vector<8x16xf32> to vector<8x1x16xf32>
      tpu.vector_store %arg6[%c0_60, %c0_61, %c0_62], %95 {strides = array<i32>} : memref<8x4x16xf32, #tpu.memory_space<vmem>>, vector<8x1x16xf32>,
      %c1_63 = arith.constant 1 : index
      %c0_64 = arith.constant 0 : index
      %c0_65 = arith.constant 0 : index
      %96 = vector.load %arg7[%c1_63, %c0_64, %c0_65] : memref<4x8x16xf32, #tpu.memory_space<vmem>>, vector<1x8x16xf32>
      %97 = vector.shape_cast %96 : vector<1x8x16xf32> to vector<8x16xf32>
      %c0_66 = arith.constant 0 : index
      %c1_67 = arith.constant 1 : index
      %c0_68 = arith.constant 0 : index
      %98 = vector.load %arg6[%c0_66, %c1_67, %c0_68] : memref<8x4x16xf32, #tpu.memory_space<vmem>>, vector<8x1x16xf32>
      %99 = vector.shape_cast %98 : vector<8x1x16xf32> to vector<8x16xf32>
      %100 = vector.shape_cast %97 : vector<8x16xf32> to vector<8x1x16xf32>
      tpu.vector_store %arg6[%c0_66, %c1_67, %c0_68], %100 {strides = array<i32>} : memref<8x4x16xf32, #tpu.memory_space<vmem>>, vector<8x1x16xf32>,
      %c2_69 = arith.constant 2 : index
      %c0_70 = arith.constant 0 : index
      %c0_71 = arith.constant 0 : index
      %101 = vector.load %arg7[%c2_69, %c0_70, %c0_71] : memref<4x8x16xf32, #tpu.memory_space<vmem>>, vector<1x8x16xf32>
      %102 = vector.shape_cast %101 : vector<1x8x16xf32> to vector<8x16xf32>
      %c0_72 = arith.constant 0 : index
      %c2_73 = arith.constant 2 : index
      %c0_74 = arith.constant 0 : index
      %103 = vector.load %arg6[%c0_72, %c2_73, %c0_74] : memref<8x4x16xf32, #tpu.memory_space<vmem>>, vector<8x1x16xf32>
      %104 = vector.shape_cast %103 : vector<8x1x16xf32> to vector<8x16xf32>
      %105 = vector.shape_cast %102 : vector<8x16xf32> to vector<8x1x16xf32>
      tpu.vector_store %arg6[%c0_72, %c2_73, %c0_74], %105 {strides = array<i32>} : memref<8x4x16xf32, #tpu.memory_space<vmem>>, vector<8x1x16xf32>,
      %c3_75 = arith.constant 3 : index
      %c0_76 = arith.constant 0 : index
      %c0_77 = arith.constant 0 : index
      %106 = vector.load %arg7[%c3_75, %c0_76, %c0_77] : memref<4x8x16xf32, #tpu.memory_space<vmem>>, vector<1x8x16xf32>
      %107 = vector.shape_cast %106 : vector<1x8x16xf32> to vector<8x16xf32>
      %c0_78 = arith.constant 0 : index
      %c3_79 = arith.constant 3 : index
      %c0_80 = arith.constant 0 : index
      %108 = vector.load %arg6[%c0_78, %c3_79, %c0_80] : memref<8x4x16xf32, #tpu.memory_space<vmem>>, vector<8x1x16xf32>
      %109 = vector.shape_cast %108 : vector<8x1x16xf32> to vector<8x16xf32>
      %110 = vector.shape_cast %107 : vector<8x16xf32> to vector<8x1x16xf32>
      tpu.vector_store %arg6[%c0_78, %c3_79, %c0_80], %110 {strides = array<i32>} : memref<8x4x16xf32, #tpu.memory_space<vmem>>, vector<8x1x16xf32>,
    } else {
    }
    return
  }
  func.func @transform_0(%arg0: i32, %arg1: i32) -> (i32, i32) {
    %c0_i32 = arith.constant 0 : i32
    %c0_i32_0 = arith.constant 0 : i32
    %c0_i32_1 = arith.constant 0 : i32
    return %c0_i32, %c0_i32_0 : i32, i32
  }
  func.func @transform_1(%arg0: i32, %arg1: i32) -> (i32, i32) {
    %c0_i32 = arith.constant 0 : i32
    %c0_i32_0 = arith.constant 0 : i32
    %c0_i32_1 = arith.constant 0 : i32
    return %c0_i32, %c0_i32_0 : i32, i32
  }
  func.func @transform_2(%arg0: i32, %arg1: i32) -> (i32, i32) {
    %c0_i32 = arith.constant 0 : i32
    %c0_i32_0 = arith.constant 0 : i32
    %c0_i32_1 = arith.constant 0 : i32
    return %c0_i32, %c0_i32_0 : i32, i32
  }
  func.func @transform_3(%arg0: i32, %arg1: i32) -> (i32, i32, i32) {
    %c0_i32 = arith.constant 0 : i32
    %c0_i32_0 = arith.constant 0 : i32
    %c0_i32_1 = arith.constant 0 : i32
    return %c0_i32, %arg1, %c0_i32_0 : i32, i32, i32
  }
  func.func @transform_4(%arg0: i32, %arg1: i32) -> (i32, i32, i32) {
    %c0_i32 = arith.constant 0 : i32
    %c0_i32_0 = arith.constant 0 : i32
    %c0_i32_1 = arith.constant 0 : i32
    return %arg0, %c0_i32, %c0_i32_0 : i32, i32, i32
  }
}

</mosaic_0001>

<llo_original>
// kernel: sparse_arch_forward.1
$region0: #{sparse_arch_forward.1}
  #allocation0 [shape = 'u32[]', space=smem, size = 0x4, offset = 0x4, fixed_abs, tag = 'smem constant byte address 0x4 - core index']
  #allocation1 [shape = 'u32[144,128]{1,0:T(1,128)}', space=vmem, size = 0x12000, scoped, tag = 'internal scratch']
  #allocation2 [shape = 'f32[4,8,16]{2,1,0:T(8,128)}', space=vmem, size = 0x4000, scoped, tag = 'scratch operand']
  %s0 = inlined_call_operand.vmem [shape: s32[1,128], index: 0, kind: input, shape index: {}]
  %s1 = inlined_call_operand.vmem [shape: s32[1,128], index: 1, kind: input, shape index: {}]
  %s2 = inlined_call_operand.vmem [shape: s32[1,128], index: 2, kind: input, shape index: {}]
  %s3 = inlined_call_operand.vmem [shape: f32[4,64,16], index: 3, kind: input, shape index: {}]
  %s4 = inlined_call_operand.hbm [shape: f32[8,4,16], index: 4, kind: output, shape index: {}]
  %s5 = sld [smem:[#allocation0]]
  $region34: #{sparse_arch_forward.1} parent=0
    _
  %s7 = ssub.s32 1, %s5
  %s8 = scalar_select 0, %s7, %s5
  $region1: #{sparse_arch_forward.1} parent=0
    #allocation3 [shape = 'u8[16384]{0}', space=vmem, size = 0x4000, scoped, tag = 'output window, operand 0, single buffered']
    #allocation4 [shape = 's32[1]{0}', space=sflag, size = 0x4, scoped, tag = 'scoped memory for sparse_arch_forward.1']
    %9 = vsyncpa [#allocation4], 0
    // Predicated region
    $region2: #{sparse_arch_forward.1} parent=1 // pred_check
      _
    $region3: #{sparse_arch_forward.1} parent=1 // pred_check_branch
      %11 = sbr.rel (0) target = $region5
    $region4: #{sparse_arch_forward.1} parent=1 // pred_region
      _
    $region5: #{sparse_arch_forward.1} parent=1 // pred_fallthru
      _
    // Predicated region
    $region6: #{sparse_arch_forward.1} parent=1 // pred_check
      _
    $region7: #{sparse_arch_forward.1} parent=1 // pred_check_branch
      %13 = sbr.rel (0) target = $region9
    $region8: #{sparse_arch_forward.1} parent=1 // pred_region
      _
    $region9: #{sparse_arch_forward.1} parent=1 // pred_fallthru
      _
    // Predicated region
    $region10: #{sparse_arch_forward.1} parent=1 // pred_check
      _
    $region11: #{sparse_arch_forward.1} parent=1 // pred_check_branch
      %15 = sbr.rel (0) target = $region13
    $region12: #{sparse_arch_forward.1} parent=1 // pred_region
      _
    $region13: #{sparse_arch_forward.1} parent=1 // pred_fallthru
      _
    // Predicated region
    $region14: #{sparse_arch_forward.1} parent=1 // pred_check
      _
    $region15: #{sparse_arch_forward.1} parent=1 // pred_check_branch
      %17 = sbr.rel (0) target = $region17
    $region16: #{sparse_arch_forward.1} parent=1 // pred_region
      _
    $region17: #{sparse_arch_forward.1} parent=1 // pred_fallthru
      _
    %p18 = scmp.eq.s32.totalorder 0, 0
    // Predicated region
    $region18: #{sparse_arch_forward.1} parent=1 // pred_check
      %p19 = pneg %p18
    $region19: #{sparse_arch_forward.1} parent=1 // pred_check_branch
      %21 = sbr.rel (%p19) target = $region21
    $region20: #{sparse_arch_forward.1} parent=1 // pred_region
      %vm22 = vcmask 130048
      %23 = vst.msk [vmem:[#allocation2] sm:$0xff] %vm22, 0.0
      %24 = vst.msk [vmem:[#allocation2 + $0x8] sm:$0xff] %vm22, 0.0
      %25 = vst.msk [vmem:[#allocation2 + $0x10] sm:$0xff] %vm22, 0.0
      %26 = vst.msk [vmem:[#allocation2 + $0x18] sm:$0xff] %vm22, 0.0
    $region21: #{sparse_arch_forward.1} parent=1 // pred_fallthru
      _
    %v27 = vld [vmem:[%s0] sm:$0x1]
    %v28 = vld [vmem:[%s1] sm:$0x1]
    %v29 = vld [vmem:[%s2] sm:$0x1]
    %v30 = vlaneseq
    %v31 = vshrl.u32 %v30, 7
    %v32 = vadd.s32 %v31, 8
    %v33 = vadd.s32 %v31, 16
    %v34 = vadd.s32 %v31, 24
    %v35 = vadd.s32 %v31, 32
    %v36 = vadd.s32 %v31, 40
    %v37 = vadd.s32 %v31, 48
    %v38 = vadd.s32 %v31, 56
    %s39 = smul.u32 0, 64
    %v40 = vstv %s39
    %v41 = vadd.s32 %v31, %v40
    %v42 = vadd.s32 %v32, %v40
    %v43 = vadd.s32 %v33, %v40
    %v44 = vadd.s32 %v34, %v40
    %v45 = vadd.s32 %v35, %v40
    %v46 = vadd.s32 %v36, %v40
    %v47 = vadd.s32 %v37, %v40
    %v48 = vadd.s32 %v38, %v40
    %v49 = vlaneseq
    %v50 = vshrl.u32 %v49, 7
    %v51 = vsub.s32 0, %v50
    %v52 = vrot.slane %v27, %v51
    %vm53 = vcmp.eq.s32.totalorder %v41, %v52
    %vm54 = vcmp.eq.s32.totalorder %v42, %v52
    %vm55 = vcmp.eq.s32.totalorder %v43, %v52
    %vm56 = vcmp.eq.s32.totalorder %v44, %v52
    %vm57 = vcmp.eq.s32.totalorder %v45, %v52
    %vm58 = vcmp.eq.s32.totalorder %v46, %v52
    %vm59 = vcmp.eq.s32.totalorder %v47, %v52
    %vm60 = vcmp.eq.s32.totalorder %v48, %v52
    %v61 = vsel %vm53, 1, 0
    %v62 = vsel %vm54, 1, 0
    %v63 = vsel %vm55, 1, 0
    %v64 = vsel %vm56, 1, 0
    %v65 = vsel %vm57, 1, 0
    %v66 = vsel %vm58, 1, 0
    %v67 = vsel %vm59, 1, 0
    %v68 = vsel %vm60, 1, 0
    %v69 = vcvt.s32.f32 %v61
    %v70 = vcvt.s32.f32 %v62
    %v71 = vcvt.s32.f32 %v63
    %v72 = vcvt.s32.f32 %v64
    %v73 = vcvt.s32.f32 %v65
    %v74 = vcvt.s32.f32 %v66
    %v75 = vcvt.s32.f32 %v67
    %v76 = vcvt.s32.f32 %v68
    %s77 = smul.u32 0, 8
    %v78 = vstv %s77
    %v79 = vadd.s32 %v31, %v78
    %v80 = vlaneseq
    %v81 = vshrl.u32 %v80, 7
    %v82 = vsub.s32 0, %v81
    %v83 = vrot.slane %v28, %v82
    %vm84 = vcmp.eq.s32.totalorder %v79, %v83
    %vm85 = vcmp.eq.s32.totalorder %v29, 0
    %v86 = vsel %vm85, 1, 0
    %v87 = vlaneseq
    %v88 = vshrl.u32 %v87, 7
    %v89 = vsub.s32 0, %v88
    %v90 = vrot.slane %v86, %v89
    %vm91 = vcmp.eq.s32.totalorder %v90, 1
    %vm92 = vmand %vm84, %vm91
    %v93 = vsel %vm92, 1.0, 0.0
    %94 = vmatprep.subr.mxu0 0.0
    %95 = vmatpush1.xpose.msra.mxu0 %v69
    %96 = vmatprep.subr.mxu0 0.0
    %97 = vmatpush1.xpose.msra.mxu0 %v70
    %98 = vmatprep.subr.mxu0 0.0
    %99 = vmatpush1.xpose.msra.mxu0 %v71
    %100 = vmatprep.subr.mxu0 0.0
    %101 = vmatpush1.xpose.msra.mxu0 %v72
    %102 = vmatprep.subr.mxu0 0.0
    %103 = vmatpush1.xpose.msra.mxu0 %v73
    %104 = vmatprep.subr.mxu0 0.0
    %105 = vmatpush1.xpose.msra.mxu0 %v74
    %106 = vmatprep.subr.mxu0 0.0
    %107 = vmatpush1.xpose.msra.mxu0 %v75
    %108 = vmatprep.subr.mxu0 0.0
    %109 = vmatpush1.xpose.msra.mxu0 %v76
    %110 = vmatprep.subr.mxu0 0.0
    %111 = vmatpush1.xpose.msra.mxu0 0.0
    %112 = vmatprep.subr.mxu0 0.0
    %113 = vmatpush1.xpose.msra.mxu0 0.0
    %114 = vmatprep.subr.mxu0 0.0
    %115 = vmatpush1.xpose.msra.mxu0 0.0
    %116 = vmatprep.subr.mxu0 0.0
    %117 = vmatpush1.xpose.msra.mxu0 0.0
    %118 = vmatprep.subr.mxu0 0.0
    %119 = vmatpush1.xpose.msra.mxu0 0.0
    %120 = vmatprep.subr.mxu0 0.0
    %121 = vmatpush1.xpose.msra.mxu0 0.0
    %122 = vmatprep.subr.mxu0 0.0
    %123 = vmatpush1.xpose.msra.mxu0 0.0
    %124 = vmatprep.subr.mxu0 0.0
    %125 = vmatpush1.xpose.msra.mxu0 0.0
    %126 = vmatprep.subr.mxu0 0.0
    %127 = vmatpush1.xpose.msra.mxu0 0.0
    %128 = vmatprep.subr.mxu0 0.0
    %129 = vmatpush1.xpose.msra.mxu0 0.0
    %130 = vmatprep.subr.mxu0 0.0
    %131 = vmatpush1.xpose.msra.mxu0 0.0
    %132 = vmatprep.subr.mxu0 0.0
    %133 = vmatpush1.xpose.msra.mxu0 0.0
    %134 = vmatprep.subr.mxu0 0.0
    %135 = vmatpush1.xpose.msra.mxu0 0.0
    %136 = vmatprep.subr.mxu0 0.0
    %137 = vmatpush1.xpose.msra.mxu0 0.0
    %138 = vmatprep.subr.mxu0 0.0
    %139 = vmatpush1.xpose.msra.mxu0 0.0
    %140 = vmatprep.subr.mxu0 0.0
    %141 = vmatpush1.xpose.msra.mxu0 0.0
    %142 = vmatprep.subr.mxu0 0.0
    %143 = vmatpush1.xpose.msra.mxu0 0.0
    %144 = vmatprep.subr.mxu0 0.0
    %145 = vmatpush1.xpose.msra.mxu0 0.0
    %146 = vmatprep.subr.mxu0 0.0
    %147 = vmatpush1.xpose.msra.mxu0 0.0
    %148 = vmatprep.subr.mxu0 0.0
    %149 = vmatpush1.xpose.msra.mxu0 0.0
    %150 = vmatprep.subr.mxu0 0.0
    %151 = vmatpush1.xpose.msra.mxu0 0.0
    %152 = vmatprep.subr.mxu0 0.0
    %153 = vmatpush1.xpose.msra.mxu0 0.0
    %154 = vmatprep.subr.mxu0 0.0
    %155 = vmatpush1.xpose.msra.mxu0 0.0
    %156 = vmatprep.subr.mxu0 0.0
    %157 = vmatpush1.xpose.msra.mxu0 0.0
    %158 = vmatprep.mubr.f32.mxu0 0.0
    %159 = vmatmul.mubr.f32.gmra.mrb[0].mxu0 %v93
    %v160 = vpop.f32.mrb[0].mxu0
    %v161 = vadd.f32 0.0, %v160
    %v162 = vpop.f32.mrb[0].mxu0
    %163 = vdwg.mxu0
    %v164 = vld [vmem:[#allocation2] sm:$0xff]
    %v165 = vld [vmem:[%s3] sm:$0xff]
    %v166 = vld [vmem:[%s3 + $0x8] sm:$0xff]
    %v167 = vld [vmem:[%s3 + $0x10] sm:$0xff]
    %v168 = vld [vmem:[%s3 + $0x18] sm:$0xff]
    %v169 = vld [vmem:[%s3 + $0x20] sm:$0xff]
    %v170 = vld [vmem:[%s3 + $0x28] sm:$0xff]
    %v171 = vld [vmem:[%s3 + $0x30] sm:$0xff]
    %v172 = vld [vmem:[%s3 + $0x38] sm:$0xff]
    %vm173 = vcmask 523264
    %v175 = vsel %vm173, %v161, 0
    %177 = vmatprep.subr.mxu0 0.0
    %178 = vmatpush1.msra.mxu0 %v165
    %179 = vmatprep.subr.mxu0 0.0
    %180 = vmatpush1.msra.mxu0 %v166
    %181 = vmatprep.subr.mxu0 0.0
    %182 = vmatpush1.msra.mxu0 %v167
    %183 = vmatprep.subr.mxu0 0.0
    %184 = vmatpush1.msra.mxu0 %v168
    %185 = vmatprep.subr.mxu0 0.0
    %186 = vmatpush1.msra.mxu0 %v169
    %187 = vmatprep.subr.mxu0 0.0
    %188 = vmatpush1.msra.mxu0 %v170
    %189 = vmatprep.subr.mxu0 0.0
    %190 = vmatpush1.msra.mxu0 %v171
    %191 = vmatprep.subr.mxu0 0.0
    %192 = vmatpush1.msra.mxu0 %v172
    %193 = vmatprep.subr.mxu0 0.0
    %194 = vmatpush1.msra.mxu0 0.0
    %195 = vmatprep.subr.mxu0 0.0
    %196 = vmatpush1.msra.mxu0 0.0
    %197 = vmatprep.subr.mxu0 0.0
    %198 = vmatpush1.msra.mxu0 0.0
    %199 = vmatprep.subr.mxu0 0.0
    %200 = vmatpush1.msra.mxu0 0.0
    %201 = vmatprep.subr.mxu0 0.0
    %202 = vmatpush1.msra.mxu0 0.0
    %203 = vmatprep.subr.mxu0 0.0
    %204 = vmatpush1.msra.mxu0 0.0
    %205 = vmatprep.subr.mxu0 0.0
    %206 = vmatpush1.msra.mxu0 0.0
    %207 = vmatprep.subr.mxu0 0.0
    %208 = vmatpush1.msra.mxu0 0.0
    %209 = vmatprep.subr.mxu0 0.0
    %210 = vmatpush1.msra.mxu0 0.0
    %211 = vmatprep.subr.mxu0 0.0
    %212 = vmatpush1.msra.mxu0 0.0
    %213 = vmatprep.subr.mxu0 0.0
    %214 = vmatpush1.msra.mxu0 0.0
    %215 = vmatprep.subr.mxu0 0.0
    %216 = vmatpush1.msra.mxu0 0.0
    %217 = vmatprep.subr.mxu0 0.0
    %218 = vmatpush1.msra.mxu0 0.0
    %219 = vmatprep.subr.mxu0 0.0
    %220 = vmatpush1.msra.mxu0 0.0
    %221 = vmatprep.subr.mxu0 0.0
    %222 = vmatpush1.msra.mxu0 0.0
    %223 = vmatprep.subr.mxu0 0.0
    %224 = vmatpush1.msra.mxu0 0.0
    %225 = vmatprep.subr.mxu0 0.0
    %226 = vmatpush1.msra.mxu0 0.0
    %227 = vmatprep.subr.mxu0 0.0
    %228 = vmatpush1.msra.mxu0 0.0
    %229 = vmatprep.subr.mxu0 0.0
    %230 = vmatpush1.msra.mxu0 0.0
    %231 = vmatprep.subr.mxu0 0.0
    %232 = vmatpush1.msra.mxu0 0.0
    %233 = vmatprep.subr.mxu0 0.0
    %234 = vmatpush1.msra.mxu0 0.0
    %235 = vmatprep.subr.mxu0 0.0
    %236 = vmatpush1.msra.mxu0 0.0
    %237 = vmatprep.subr.mxu0 0.0
    %238 = vmatpush1.msra.mxu0 0.0
    %239 = vmatprep.subr.mxu0 0.0
    %240 = vmatpush1.msra.mxu0 0.0
    %241 = vmatprep.mubr.f32.mxu0 0.0
    %242 = vmatmul.mubr.f32.gmra.mrb[0].mxu0 %v175
    %v243 = vpop.f32.mrb[0].mxu0
    %v244 = vadd.f32 0.0, %v243
    %v245 = vpop.f32.mrb[0].mxu0
    %246 = vdwg.mxu0
    %v247 = vadd.f32 %v164, %v244
    %vm248 = vcmask 130048
    %249 = vst.msk [vmem:[#allocation2] sm:$0xff] %vm248, %v247
    %vm250 = vcmp.eq.s32.totalorder %v29, 1
    %v251 = vsel %vm250, 1, 0
    %v252 = vlaneseq
    %v253 = vshrl.u32 %v252, 7
    %v254 = vsub.s32 0, %v253
    %v255 = vrot.slane %v251, %v254
    %vm256 = vcmp.eq.s32.totalorder %v255, 1
    %vm257 = vmand %vm84, %vm256
    %v258 = vsel %vm257, 1.0, 0.0
    %259 = vmatprep.subr.mxu0 0.0
    %260 = vmatpush1.xpose.msra.mxu0 %v69
    %261 = vmatprep.subr.mxu0 0.0
    %262 = vmatpush1.xpose.msra.mxu0 %v70
    %263 = vmatprep.subr.mxu0 0.0
    %264 = vmatpush1.xpose.msra.mxu0 %v71
    %265 = vmatprep.subr.mxu0 0.0
    %266 = vmatpush1.xpose.msra.mxu0 %v72
    %267 = vmatprep.subr.mxu0 0.0
    %268 = vmatpush1.xpose.msra.mxu0 %v73
    %269 = vmatprep.subr.mxu0 0.0
    %270 = vmatpush1.xpose.msra.mxu0 %v74
    %271 = vmatprep.subr.mxu0 0.0
    %272 = vmatpush1.xpose.msra.mxu0 %v75
    %273 = vmatprep.subr.mxu0 0.0
    %274 = vmatpush1.xpose.msra.mxu0 %v76
    %275 = vmatprep.subr.mxu0 0.0
    %276 = vmatpush1.xpose.msra.mxu0 0.0
    %277 = vmatprep.subr.mxu0 0.0
    %278 = vmatpush1.xpose.msra.mxu0 0.0
    %279 = vmatprep.subr.mxu0 0.0
    %280 = vmatpush1.xpose.msra.mxu0 0.0
    %281 = vmatprep.subr.mxu0 0.0
    %282 = vmatpush1.xpose.msra.mxu0 0.0
    %283 = vmatprep.subr.mxu0 0.0
    %284 = vmatpush1.xpose.msra.mxu0 0.0
    %285 = vmatprep.subr.mxu0 0.0
    %286 = vmatpush1.xpose.msra.mxu0 0.0
    %287 = vmatprep.subr.mxu0 0.0
    %288 = vmatpush1.xpose.msra.mxu0 0.0
    %289 = vmatprep.subr.mxu0 0.0
    %290 = vmatpush1.xpose.msra.mxu0 0.0
    %291 = vmatprep.subr.mxu0 0.0
    %292 = vmatpush1.xpose.msra.mxu0 0.0
    %293 = vmatprep.subr.mxu0 0.0
    %294 = vmatpush1.xpose.msra.mxu0 0.0
    %295 = vmatprep.subr.mxu0 0.0
    %296 = vmatpush1.xpose.msra.mxu0 0.0
    %297 = vmatprep.subr.mxu0 0.0
    %298 = vmatpush1.xpose.msra.mxu0 0.0
    %299 = vmatprep.subr.mxu0 0.0
    %300 = vmatpush1.xpose.msra.mxu0 0.0
    %301 = vmatprep.subr.mxu0 0.0
    %302 = vmatpush1.xpose.msra.mxu0 0.0
    %303 = vmatprep.subr.mxu0 0.0
    %304 = vmatpush1.xpose.msra.mxu0 0.0
    %305 = vmatprep.subr.mxu0 0.0
    %306 = vmatpush1.xpose.msra.mxu0 0.0
    %307 = vmatprep.subr.mxu0 0.0
    %308 = vmatpush1.xpose.msra.mxu0 0.0
    %309 = vmatprep.subr.mxu0 0.0
    %310 = vmatpush1.xpose.msra.mxu0 0.0
    %311 = vmatprep.subr.mxu0 0.0
    %312 = vmatpush1.xpose.msra.mxu0 0.0
    %313 = vmatprep.subr.mxu0 0.0
    %314 = vmatpush1.xpose.msra.mxu0 0.0
    %315 = vmatprep.subr.mxu0 0.0
    %316 = vmatpush1.xpose.msra.mxu0 0.0
    %317 = vmatprep.subr.mxu0 0.0
    %318 = vmatpush1.xpose.msra.mxu0 0.0
    %319 = vmatprep.subr.mxu0 0.0
    %320 = vmatpush1.xpose.msra.mxu0 0.0
    %321 = vmatprep.subr.mxu0 0.0
    %322 = vmatpush1.xpose.msra.mxu0 0.0
    %323 = vmatprep.mubr.f32.mxu0 0.0
    %324 = vmatmul.mubr.f32.gmra.mrb[0].mxu0 %v258
    %v325 = vpop.f32.mrb[0].mxu0
    %v326 = vadd.f32 0.0, %v325
    %v327 = vpop.f32.mrb[0].mxu0
    %328 = vdwg.mxu0
    %s329 = scalar_lea.vmem [#allocation2], 8
    %v330 = vld [vmem:[%s329] sm:$0xff]
    %s331 = scalar_lea.vmem %s3, 64
    %v332 = vld [vmem:[%s331] sm:$0xff]
    %v333 = vld [vmem:[%s331 + $0x8] sm:$0xff]
    %v334 = vld [vmem:[%s331 + $0x10] sm:$0xff]
    %v335 = vld [vmem:[%s331 + $0x18] sm:$0xff]
    %v336 = vld [vmem:[%s331 + $0x20] sm:$0xff]
    %v337 = vld [vmem:[%s331 + $0x28] sm:$0xff]
    %v338 = vld [vmem:[%s331 + $0x30] sm:$0xff]
    %v339 = vld [vmem:[%s331 + $0x38] sm:$0xff]
    %v341 = vsel %vm173, %v326, 0
    %343 = vmatprep.subr.mxu0 0.0
    %344 = vmatpush1.msra.mxu0 %v332
    %345 = vmatprep.subr.mxu0 0.0
    %346 = vmatpush1.msra.mxu0 %v333
    %347 = vmatprep.subr.mxu0 0.0
    %348 = vmatpush1.msra.mxu0 %v334
    %349 = vmatprep.subr.mxu0 0.0
    %350 = vmatpush1.msra.mxu0 %v335
    %351 = vmatprep.subr.mxu0 0.0
    %352 = vmatpush1.msra.mxu0 %v336
    %353 = vmatprep.subr.mxu0 0.0
    %354 = vmatpush1.msra.mxu0 %v337
    %355 = vmatprep.subr.mxu0 0.0
    %356 = vmatpush1.msra.mxu0 %v338
    %357 = vmatprep.subr.mxu0 0.0
    %358 = vmatpush1.msra.mxu0 %v339
    %359 = vmatprep.subr.mxu0 0.0
    %360 = vmatpush1.msra.mxu0 0.0
    %361 = vmatprep.subr.mxu0 0.0
    %362 = vmatpush1.msra.mxu0 0.0
    %363 = vmatprep.subr.mxu0 0.0
    %364 = vmatpush1.msra.mxu0 0.0
    %365 = vmatprep.subr.mxu0 0.0
    %366 = vmatpush1.msra.mxu0 0.0
    %367 = vmatprep.subr.mxu0 0.0
    %368 = vmatpush1.msra.mxu0 0.0
    %369 = vmatprep.subr.mxu0 0.0
    %370 = vmatpush1.msra.mxu0 0.0
    %371 = vmatprep.subr.mxu0 0.0
    %372 = vmatpush1.msra.mxu0 0.0
    %373 = vmatprep.subr.mxu0 0.0
    %374 = vmatpush1.msra.mxu0 0.0
    %375 = vmatprep.subr.mxu0 0.0
    %376 = vmatpush1.msra.mxu0 0.0
    %377 = vmatprep.subr.mxu0 0.0
    %378 = vmatpush1.msra.mxu0 0.0
    %379 = vmatprep.subr.mxu0 0.0
    %380 = vmatpush1.msra.mxu0 0.0
    %381 = vmatprep.subr.mxu0 0.0
    %382 = vmatpush1.msra.mxu0 0.0
    %383 = vmatprep.subr.mxu0 0.0
    %384 = vmatpush1.msra.mxu0 0.0
    %385 = vmatprep.subr.mxu0 0.0
    %386 = vmatpush1.msra.mxu0 0.0
    %387 = vmatprep.subr.mxu0 0.0
    %388 = vmatpush1.msra.mxu0 0.0
    %389 = vmatprep.subr.mxu0 0.0
    %390 = vmatpush1.msra.mxu0 0.0
    %391 = vmatprep.subr.mxu0 0.0
    %392 = vmatpush1.msra.mxu0 0.0
    %393 = vmatprep.subr.mxu0 0.0
    %394 = vmatpush1.msra.mxu0 0.0
    %395 = vmatprep.subr.mxu0 0.0
    %396 = vmatpush1.msra.mxu0 0.0
    %397 = vmatprep.subr.mxu0 0.0
    %398 = vmatpush1.msra.mxu0 0.0
    %399 = vmatprep.subr.mxu0 0.0
    %400 = vmatpush1.msra.mxu0 0.0
    %401 = vmatprep.subr.mxu0 0.0
    %402 = vmatpush1.msra.mxu0 0.0
    %403 = vmatprep.subr.mxu0 0.0
    %404 = vmatpush1.msra.mxu0 0.0
    %405 = vmatprep.subr.mxu0 0.0
    %406 = vmatpush1.msra.mxu0 0.0
    %407 = vmatprep.mubr.f32.mxu0 0.0
    %408 = vmatmul.mubr.f32.gmra.mrb[0].mxu0 %v341
    %v409 = vpop.f32.mrb[0].mxu0
    %v410 = vadd.f32 0.0, %v409
    %v411 = vpop.f32.mrb[0].mxu0
    %412 = vdwg.mxu0
    %v413 = vadd.f32 %v330, %v410
    %414 = vst.msk [vmem:[%s329] sm:$0xff] %vm248, %v413
    %vm415 = vcmp.eq.s32.totalorder %v29, 2
    %v416 = vsel %vm415, 1, 0
    %v417 = vlaneseq
    %v418 = vshrl.u32 %v417, 7
    %v419 = vsub.s32 0, %v418
    %v420 = vrot.slane %v416, %v419
    %vm421 = vcmp.eq.s32.totalorder %v420, 1
    %vm422 = vmand %vm84, %vm421
    %v423 = vsel %vm422, 1.0, 0.0
    %424 = vmatprep.subr.mxu0 0.0
    %425 = vmatpush1.xpose.msra.mxu0 %v69
    %426 = vmatprep.subr.mxu0 0.0
    %427 = vmatpush1.xpose.msra.mxu0 %v70
    %428 = vmatprep.subr.mxu0 0.0
    %429 = vmatpush1.xpose.msra.mxu0 %v71
    %430 = vmatprep.subr.mxu0 0.0
    %431 = vmatpush1.xpose.msra.mxu0 %v72
    %432 = vmatprep.subr.mxu0 0.0
    %433 = vmatpush1.xpose.msra.mxu0 %v73
    %434 = vmatprep.subr.mxu0 0.0
    %435 = vmatpush1.xpose.msra.mxu0 %v74
    %436 = vmatprep.subr.mxu0 0.0
    %437 = vmatpush1.xpose.msra.mxu0 %v75
    %438 = vmatprep.subr.mxu0 0.0
    %439 = vmatpush1.xpose.msra.mxu0 %v76
    %440 = vmatprep.subr.mxu0 0.0
    %441 = vmatpush1.xpose.msra.mxu0 0.0
    %442 = vmatprep.subr.mxu0 0.0
    %443 = vmatpush1.xpose.msra.mxu0 0.0
    %444 = vmatprep.subr.mxu0 0.0
    %445 = vmatpush1.xpose.msra.mxu0 0.0
    %446 = vmatprep.subr.mxu0 0.0
    %447 = vmatpush1.xpose.msra.mxu0 0.0
    %448 = vmatprep.subr.mxu0 0.0
    %449 = vmatpush1.xpose.msra.mxu0 0.0
    %450 = vmatprep.subr.mxu0 0.0
    %451 = vmatpush1.xpose.msra.mxu0 0.0
    %452 = vmatprep.subr.mxu0 0.0
    %453 = vmatpush1.xpose.msra.mxu0 0.0
    %454 = vmatprep.subr.mxu0 0.0
    %455 = vmatpush1.xpose.msra.mxu0 0.0
    %456 = vmatprep.subr.mxu0 0.0
    %457 = vmatpush1.xpose.msra.mxu0 0.0
    %458 = vmatprep.subr.mxu0 0.0
    %459 = vmatpush1.xpose.msra.mxu0 0.0
    %460 = vmatprep.subr.mxu0 0.0
    %461 = vmatpush1.xpose.msra.mxu0 0.0
    %462 = vmatprep.subr.mxu0 0.0
    %463 = vmatpush1.xpose.msra.mxu0 0.0
    %464 = vmatprep.subr.mxu0 0.0
    %465 = vmatpush1.xpose.msra.mxu0 0.0
    %466 = vmatprep.subr.mxu0 0.0
    %467 = vmatpush1.xpose.msra.mxu0 0.0
    %468 = vmatprep.subr.mxu0 0.0
    %469 = vmatpush1.xpose.msra.mxu0 0.0
    %470 = vmatprep.subr.mxu0 0.0
    %471 = vmatpush1.xpose.msra.mxu0 0.0
    %472 = vmatprep.subr.mxu0 0.0
    %473 = vmatpush1.xpose.msra.mxu0 0.0
    %474 = vmatprep.subr.mxu0 0.0
    %475 = vmatpush1.xpose.msra.mxu0 0.0
    %476 = vmatprep.subr.mxu0 0.0
    %477 = vmatpush1.xpose.msra.mxu0 0.0
    %478 = vmatprep.subr.mxu0 0.0
    %479 = vmatpush1.xpose.msra.mxu0 0.0
    %480 = vmatprep.subr.mxu0 0.0
    %481 = vmatpush1.xpose.msra.mxu0 0.0
    %482 = vmatprep.subr.mxu0 0.0
    %483 = vmatpush1.xpose.msra.mxu0 0.0
    %484 = vmatprep.subr.mxu0 0.0
    %485 = vmatpush1.xpose.msra.mxu0 0.0
    %486 = vmatprep.subr.mxu0 0.0
    %487 = vmatpush1.xpose.msra.mxu0 0.0
    %488 = vmatprep.mubr.f32.mxu0 0.0
    %489 = vmatmul.mubr.f32.gmra.mrb[0].mxu0 %v423
    %v490 = vpop.f32.mrb[0].mxu0
    %v491 = vadd.f32 0.0, %v490
    %v492 = vpop.f32.mrb[0].mxu0
    %493 = vdwg.mxu0
    %s494 = scalar_lea.vmem [#allocation2], 16
    %v495 = vld [vmem:[%s494] sm:$0xff]
    %s496 = scalar_lea.vmem %s3, 128
    %v497 = vld [vmem:[%s496] sm:$0xff]
    %v498 = vld [vmem:[%s496 + $0x8] sm:$0xff]
    %v499 = vld [vmem:[%s496 + $0x10] sm:$0xff]
    %v500 = vld [vmem:[%s496 + $0x18] sm:$0xff]
    %v501 = vld [vmem:[%s496 + $0x20] sm:$0xff]
    %v502 = vld [vmem:[%s496 + $0x28] sm:$0xff]
    %v503 = vld [vmem:[%s496 + $0x30] sm:$0xff]
    %v504 = vld [vmem:[%s496 + $0x38] sm:$0xff]
    %v506 = vsel %vm173, %v491, 0
    %508 = vmatprep.subr.mxu0 0.0
    %509 = vmatpush1.msra.mxu0 %v497
    %510 = vmatprep.subr.mxu0 0.0
    %511 = vmatpush1.msra.mxu0 %v498
    %512 = vmatprep.subr.mxu0 0.0
    %513 = vmatpush1.msra.mxu0 %v499
    %514 = vmatprep.subr.mxu0 0.0
    %515 = vmatpush1.msra.mxu0 %v500
    %516 = vmatprep.subr.mxu0 0.0
    %517 = vmatpush1.msra.mxu0 %v501
    %518 = vmatprep.subr.mxu0 0.0
    %519 = vmatpush1.msra.mxu0 %v502
    %520 = vmatprep.subr.mxu0 0.0
    %521 = vmatpush1.msra.mxu0 %v503
    %522 = vmatprep.subr.mxu0 0.0
    %523 = vmatpush1.msra.mxu0 %v504
    %524 = vmatprep.subr.mxu0 0.0
    %525 = vmatpush1.msra.mxu0 0.0
    %526 = vmatprep.subr.mxu0 0.0
    %527 = vmatpush1.msra.mxu0 0.0
    %528 = vmatprep.subr.mxu0 0.0
    %529 = vmatpush1.msra.mxu0 0.0
    %530 = vmatprep.subr.mxu0 0.0
    %531 = vmatpush1.msra.mxu0 0.0
    %532 = vmatprep.subr.mxu0 0.0
    %533 = vmatpush1.msra.mxu0 0.0
    %534 = vmatprep.subr.mxu0 0.0
    %535 = vmatpush1.msra.mxu0 0.0
    %536 = vmatprep.subr.mxu0 0.0
    %537 = vmatpush1.msra.mxu0 0.0
    %538 = vmatprep.subr.mxu0 0.0
    %539 = vmatpush1.msra.mxu0 0.0
    %540 = vmatprep.subr.mxu0 0.0
    %541 = vmatpush1.msra.mxu0 0.0
    %542 = vmatprep.subr.mxu0 0.0
    %543 = vmatpush1.msra.mxu0 0.0
    %544 = vmatprep.subr.mxu0 0.0
    %545 = vmatpush1.msra.mxu0 0.0
    %546 = vmatprep.subr.mxu0 0.0
    %547 = vmatpush1.msra.mxu0 0.0
    %548 = vmatprep.subr.mxu0 0.0
    %549 = vmatpush1.msra.mxu0 0.0
    %550 = vmatprep.subr.mxu0 0.0
    %551 = vmatpush1.msra.mxu0 0.0
    %552 = vmatprep.subr.mxu0 0.0
    %553 = vmatpush1.msra.mxu0 0.0
    %554 = vmatprep.subr.mxu0 0.0
    %555 = vmatpush1.msra.mxu0 0.0
    %556 = vmatprep.subr.mxu0 0.0
    %557 = vmatpush1.msra.mxu0 0.0
    %558 = vmatprep.subr.mxu0 0.0
    %559 = vmatpush1.msra.mxu0 0.0
    %560 = vmatprep.subr.mxu0 0.0
    %561 = vmatpush1.msra.mxu0 0.0
    %562 = vmatprep.subr.mxu0 0.0
    %563 = vmatpush1.msra.mxu0 0.0
    %564 = vmatprep.subr.mxu0 0.0
    %565 = vmatpush1.msra.mxu0 0.0
    %566 = vmatprep.subr.mxu0 0.0
    %567 = vmatpush1.msra.mxu0 0.0
    %568 = vmatprep.subr.mxu0 0.0
    %569 = vmatpush1.msra.mxu0 0.0
    %570 = vmatprep.subr.mxu0 0.0
    %571 = vmatpush1.msra.mxu0 0.0
    %572 = vmatprep.mubr.f32.mxu0 0.0
    %573 = vmatmul.mubr.f32.gmra.mrb[0].mxu0 %v506
    %v574 = vpop.f32.mrb[0].mxu0
    %v575 = vadd.f32 0.0, %v574
    %v576 = vpop.f32.mrb[0].mxu0
    %577 = vdwg.mxu0
    %v578 = vadd.f32 %v495, %v575
    %579 = vst.msk [vmem:[%s494] sm:$0xff] %vm248, %v578
    %vm580 = vcmp.eq.s32.totalorder %v29, 3
    %v581 = vsel %vm580, 1, 0
    %v582 = vlaneseq
    %v583 = vshrl.u32 %v582, 7
    %v584 = vsub.s32 0, %v583
    %v585 = vrot.slane %v581, %v584
    %vm586 = vcmp.eq.s32.totalorder %v585, 1
    %vm587 = vmand %vm84, %vm586
    %v588 = vsel %vm587, 1.0, 0.0
    %589 = vmatprep.subr.mxu0 0.0
    %590 = vmatpush1.xpose.msra.mxu0 %v69
    %591 = vmatprep.subr.mxu0 0.0
    %592 = vmatpush1.xpose.msra.mxu0 %v70
    %593 = vmatprep.subr.mxu0 0.0
    %594 = vmatpush1.xpose.msra.mxu0 %v71
    %595 = vmatprep.subr.mxu0 0.0
    %596 = vmatpush1.xpose.msra.mxu0 %v72
    %597 = vmatprep.subr.mxu0 0.0
    %598 = vmatpush1.xpose.msra.mxu0 %v73
    %599 = vmatprep.subr.mxu0 0.0
    %600 = vmatpush1.xpose.msra.mxu0 %v74
    %601 = vmatprep.subr.mxu0 0.0
    %602 = vmatpush1.xpose.msra.mxu0 %v75
    %603 = vmatprep.subr.mxu0 0.0
    %604 = vmatpush1.xpose.msra.mxu0 %v76
    %605 = vmatprep.subr.mxu0 0.0
    %606 = vmatpush1.xpose.msra.mxu0 0.0
    %607 = vmatprep.subr.mxu0 0.0
    %608 = vmatpush1.xpose.msra.mxu0 0.0
    %609 = vmatprep.subr.mxu0 0.0
    %610 = vmatpush1.xpose.msra.mxu0 0.0
    %611 = vmatprep.subr.mxu0 0.0
    %612 = vmatpush1.xpose.msra.mxu0 0.0
    %613 = vmatprep.subr.mxu0 0.0
    %614 = vmatpush1.xpose.msra.mxu0 0.0
    %615 = vmatprep.subr.mxu0 0.0
    %616 = vmatpush1.xpose.msra.mxu0 0.0
    %617 = vmatprep.subr.mxu0 0.0
    %618 = vmatpush1.xpose.msra.mxu0 0.0
    %619 = vmatprep.subr.mxu0 0.0
    %620 = vmatpush1.xpose.msra.mxu0 0.0
    %621 = vmatprep.subr.mxu0 0.0
    %622 = vmatpush1.xpose.msra.mxu0 0.0
    %623 = vmatprep.subr.mxu0 0.0
    %624 = vmatpush1.xpose.msra.mxu0 0.0
    %625 = vmatprep.subr.mxu0 0.0
    %626 = vmatpush1.xpose.msra.mxu0 0.0
    %627 = vmatprep.subr.mxu0 0.0
    %628 = vmatpush1.xpose.msra.mxu0 0.0
    %629 = vmatprep.subr.mxu0 0.0
    %630 = vmatpush1.xpose.msra.mxu0 0.0
    %631 = vmatprep.subr.mxu0 0.0
    %632 = vmatpush1.xpose.msra.mxu0 0.0
    %633 = vmatprep.subr.mxu0 0.0
    %634 = vmatpush1.xpose.msra.mxu0 0.0
    %635 = vmatprep.subr.mxu0 0.0
    %636 = vmatpush1.xpose.msra.mxu0 0.0
    %637 = vmatprep.subr.mxu0 0.0
    %638 = vmatpush1.xpose.msra.mxu0 0.0
    %639 = vmatprep.subr.mxu0 0.0
    %640 = vmatpush1.xpose.msra.mxu0 0.0
    %641 = vmatprep.subr.mxu0 0.0
    %642 = vmatpush1.xpose.msra.mxu0 0.0
    %643 = vmatprep.subr.mxu0 0.0
    %644 = vmatpush1.xpose.msra.mxu0 0.0
    %645 = vmatprep.subr.mxu0 0.0
    %646 = vmatpush1.xpose.msra.mxu0 0.0
    %647 = vmatprep.subr.mxu0 0.0
    %648 = vmatpush1.xpose.msra.mxu0 0.0
    %649 = vmatprep.subr.mxu0 0.0
    %650 = vmatpush1.xpose.msra.mxu0 0.0
    %651 = vmatprep.subr.mxu0 0.0
    %652 = vmatpush1.xpose.msra.mxu0 0.0
    %653 = vmatprep.mubr.f32.mxu0 0.0
    %654 = vmatmul.mubr.f32.gmra.mrb[0].mxu0 %v588
    %v655 = vpop.f32.mrb[0].mxu0
    %v656 = vadd.f32 0.0, %v655
    %v657 = vpop.f32.mrb[0].mxu0
    %658 = vdwg.mxu0
    %s659 = scalar_lea.vmem [#allocation2], 24
    %v660 = vld [vmem:[%s659] sm:$0xff]
    %s661 = scalar_lea.vmem %s3, 192
    %v662 = vld [vmem:[%s661] sm:$0xff]
    %v663 = vld [vmem:[%s661 + $0x8] sm:$0xff]
    %v664 = vld [vmem:[%s661 + $0x10] sm:$0xff]
    %v665 = vld [vmem:[%s661 + $0x18] sm:$0xff]
    %v666 = vld [vmem:[%s661 + $0x20] sm:$0xff]
    %v667 = vld [vmem:[%s661 + $0x28] sm:$0xff]
    %v668 = vld [vmem:[%s661 + $0x30] sm:$0xff]
    %v669 = vld [vmem:[%s661 + $0x38] sm:$0xff]
    %v671 = vsel %vm173, %v656, 0
    %673 = vmatprep.subr.mxu0 0.0
    %674 = vmatpush1.msra.mxu0 %v662
    %675 = vmatprep.subr.mxu0 0.0
    %676 = vmatpush1.msra.mxu0 %v663
    %677 = vmatprep.subr.mxu0 0.0
    %678 = vmatpush1.msra.mxu0 %v664
    %679 = vmatprep.subr.mxu0 0.0
    %680 = vmatpush1.msra.mxu0 %v665
    %681 = vmatprep.subr.mxu0 0.0
    %682 = vmatpush1.msra.mxu0 %v666
    %683 = vmatprep.subr.mxu0 0.0
    %684 = vmatpush1.msra.mxu0 %v667
    %685 = vmatprep.subr.mxu0 0.0
    %686 = vmatpush1.msra.mxu0 %v668
    %687 = vmatprep.subr.mxu0 0.0
    %688 = vmatpush1.msra.mxu0 %v669
    %689 = vmatprep.subr.mxu0 0.0
    %690 = vmatpush1.msra.mxu0 0.0
    %691 = vmatprep.subr.mxu0 0.0
    %692 = vmatpush1.msra.mxu0 0.0
    %693 = vmatprep.subr.mxu0 0.0
    %694 = vmatpush1.msra.mxu0 0.0
    %695 = vmatprep.subr.mxu0 0.0
    %696 = vmatpush1.msra.mxu0 0.0
    %697 = vmatprep.subr.mxu0 0.0
    %698 = vmatpush1.msra.mxu0 0.0
    %699 = vmatprep.subr.mxu0 0.0
    %700 = vmatpush1.msra.mxu0 0.0
    %701 = vmatprep.subr.mxu0 0.0
    %702 = vmatpush1.msra.mxu0 0.0
    %703 = vmatprep.subr.mxu0 0.0
    %704 = vmatpush1.msra.mxu0 0.0
    %705 = vmatprep.subr.mxu0 0.0
    %706 = vmatpush1.msra.mxu0 0.0
    %707 = vmatprep.subr.mxu0 0.0
    %708 = vmatpush1.msra.mxu0 0.0
    %709 = vmatprep.subr.mxu0 0.0
    %710 = vmatpush1.msra.mxu0 0.0
    %711 = vmatprep.subr.mxu0 0.0
    %712 = vmatpush1.msra.mxu0 0.0
    %713 = vmatprep.subr.mxu0 0.0
    %714 = vmatpush1.msra.mxu0 0.0
    %715 = vmatprep.subr.mxu0 0.0
    %716 = vmatpush1.msra.mxu0 0.0
    %717 = vmatprep.subr.mxu0 0.0
    %718 = vmatpush1.msra.mxu0 0.0
    %719 = vmatprep.subr.mxu0 0.0
    %720 = vmatpush1.msra.mxu0 0.0
    %721 = vmatprep.subr.mxu0 0.0
    %722 = vmatpush1.msra.mxu0 0.0
    %723 = vmatprep.subr.mxu0 0.0
    %724 = vmatpush1.msra.mxu0 0.0
    %725 = vmatprep.subr.mxu0 0.0
    %726 = vmatpush1.msra.mxu0 0.0
    %727 = vmatprep.subr.mxu0 0.0
    %728 = vmatpush1.msra.mxu0 0.0
    %729 = vmatprep.subr.mxu0 0.0
    %730 = vmatpush1.msra.mxu0 0.0
    %731 = vmatprep.subr.mxu0 0.0
    %732 = vmatpush1.msra.mxu0 0.0
    %733 = vmatprep.subr.mxu0 0.0
    %734 = vmatpush1.msra.mxu0 0.0
    %735 = vmatprep.subr.mxu0 0.0
    %736 = vmatpush1.msra.mxu0 0.0
    %737 = vmatprep.mubr.f32.mxu0 0.0
    %738 = vmatmul.mubr.f32.gmra.mrb[0].mxu0 %v671
    %v739 = vpop.f32.mrb[0].mxu0
    %v740 = vadd.f32 0.0, %v739
    %v741 = vpop.f32.mrb[0].mxu0
    %742 = vdwg.mxu0
    %v743 = vadd.f32 %v660, %v740
    %744 = vst.msk [vmem:[%s659] sm:$0xff] %vm248, %v743
    // Predicated region
    $region22: #{sparse_arch_forward.1} parent=1 // pred_check
      %p745 = pneg %p18
    $region23: #{sparse_arch_forward.1} parent=1 // pred_check_branch
      %747 = sbr.rel (%p745) target = $region25
    $region24: #{sparse_arch_forward.1} parent=1 // pred_region
      %v748 = vld [vmem:[#allocation2] sm:$0xff]
      %v750 = vcombine.high %v748, %v748
      %v752 = vunpack.c.l.s4 1966171168
      %v753 = vunpack.c.0.s8 %v752
      %v754 = vlaneseq
      %v755 = vshrl.u32 %v754, 7
      %v756 = vsub.s32 %v753, %v755
      %v757 = vrot.slane %v748, %v756
      %v759 = vunpack.c.l.s4 1966171168
      %v760 = vunpack.c.0.s8 %v759
      %v761 = vlaneseq
      %v762 = vshrl.u32 %v761, 7
      %v763 = vsub.s32 %v760, %v762
      %v764 = vrot.slane %v750, %v763
      %v765 = vcombine.high %v757, %v757
      %v766 = vcombine.high %v764, %v764
      %v768 = vunpack.c.l.s4 1966171168
      %v769 = vunpack.c.0.s8 %v768
      %v770 = vlaneseq
      %v771 = vshrl.u32 %v770, 7
      %v772 = vsub.s32 %v769, %v771
      %v773 = vrot.slane %v757, %v772
      %v775 = vunpack.c.l.s4 1966171168
      %v776 = vunpack.c.0.s8 %v775
      %v777 = vlaneseq
      %v778 = vshrl.u32 %v777, 7
      %v779 = vsub.s32 %v776, %v778
      %v780 = vrot.slane %v764, %v779
      %v782 = vunpack.c.l.s4 1966171168
      %v783 = vunpack.c.0.s8 %v782
      %v784 = vlaneseq
      %v785 = vshrl.u32 %v784, 7
      %v786 = vsub.s32 %v783, %v785
      %v787 = vrot.slane %v765, %v786
      %v789 = vunpack.c.l.s4 1966171168
      %v790 = vunpack.c.0.s8 %v789
      %v791 = vlaneseq
      %v792 = vshrl.u32 %v791, 7
      %v793 = vsub.s32 %v790, %v792
      %v794 = vrot.slane %v766, %v793
      %v795 = vcombine.high %v773, %v773
      %v796 = vcombine.high %v780, %v780
      %v797 = vcombine.high %v787, %v787
      %v798 = vcombine.high %v794, %v794
      %vm807 = vcmask 122880
      %808 = vst.msk [vmem:[#allocation3] sm:$0x1] %vm807, %v773
      %809 = vst.msk [vmem:[#allocation3 + $0x4] sm:$0x1] %vm807, %v787
      %810 = vst.msk [vmem:[#allocation3 + $0x8] sm:$0x1] %vm807, %v795
      %811 = vst.msk [vmem:[#allocation3 + $0xc] sm:$0x1] %vm807, %v797
      %812 = vst.msk [vmem:[#allocation3 + $0x10] sm:$0x1] %vm807, %v780
      %813 = vst.msk [vmem:[#allocation3 + $0x14] sm:$0x1] %vm807, %v794
      %814 = vst.msk [vmem:[#allocation3 + $0x18] sm:$0x1] %vm807, %v796
      %815 = vst.msk [vmem:[#allocation3 + $0x1c] sm:$0x1] %vm807, %v798
      %v816 = vld [vmem:[%s329] sm:$0xff]
      %v818 = vcombine.high %v816, %v816
      %v820 = vunpack.c.l.s4 1966171168
      %v821 = vunpack.c.0.s8 %v820
      %v822 = vlaneseq
      %v823 = vshrl.u32 %v822, 7
      %v824 = vsub.s32 %v821, %v823
      %v825 = vrot.slane %v816, %v824
      %v827 = vunpack.c.l.s4 1966171168
      %v828 = vunpack.c.0.s8 %v827
      %v829 = vlaneseq
      %v830 = vshrl.u32 %v829, 7
      %v831 = vsub.s32 %v828, %v830
      %v832 = vrot.slane %v818, %v831
      %v833 = vcombine.high %v825, %v825
      %v834 = vcombine.high %v832, %v832
      %v836 = vunpack.c.l.s4 1966171168
      %v837 = vunpack.c.0.s8 %v836
      %v838 = vlaneseq
      %v839 = vshrl.u32 %v838, 7
      %v840 = vsub.s32 %v837, %v839
      %v841 = vrot.slane %v825, %v840
      %v843 = vunpack.c.l.s4 1966171168
      %v844 = vunpack.c.0.s8 %v843
      %v845 = vlaneseq
      %v846 = vshrl.u32 %v845, 7
      %v847 = vsub.s32 %v844, %v846
      %v848 = vrot.slane %v832, %v847
      %v850 = vunpack.c.l.s4 1966171168
      %v851 = vunpack.c.0.s8 %v850
      %v852 = vlaneseq
      %v853 = vshrl.u32 %v852, 7
      %v854 = vsub.s32 %v851, %v853
      %v855 = vrot.slane %v833, %v854
      %v857 = vunpack.c.l.s4 1966171168
      %v858 = vunpack.c.0.s8 %v857
      %v859 = vlaneseq
      %v860 = vshrl.u32 %v859, 7
      %v861 = vsub.s32 %v858, %v860
      %v862 = vrot.slane %v834, %v861
      %v863 = vcombine.high %v841, %v841
      %v864 = vcombine.high %v848, %v848
      %v865 = vcombine.high %v855, %v855
      %v866 = vcombine.high %v862, %v862
      %875 = vst.msk [vmem:[#allocation3 + $0x1] sm:$0x1] %vm807, %v841
      %876 = vst.msk [vmem:[#allocation3 + $0x5] sm:$0x1] %vm807, %v855
      %877 = vst.msk [vmem:[#allocation3 + $0x9] sm:$0x1] %vm807, %v863
      %878 = vst.msk [vmem:[#allocation3 + $0xd] sm:$0x1] %vm807, %v865
      %879 = vst.msk [vmem:[#allocation3 + $0x11] sm:$0x1] %vm807, %v848
      %880 = vst.msk [vmem:[#allocation3 + $0x15] sm:$0x1] %vm807, %v862
      %881 = vst.msk [vmem:[#allocation3 + $0x19] sm:$0x1] %vm807, %v864
      %882 = vst.msk [vmem:[#allocation3 + $0x1d] sm:$0x1] %vm807, %v866
      %v883 = vld [vmem:[%s494] sm:$0xff]
      %v885 = vcombine.high %v883, %v883
      %v887 = vunpack.c.l.s4 1966171168
      %v888 = vunpack.c.0.s8 %v887
      %v889 = vlaneseq
      %v890 = vshrl.u32 %v889, 7
      %v891 = vsub.s32 %v888, %v890
      %v892 = vrot.slane %v883, %v891
      %v894 = vunpack.c.l.s4 1966171168
      %v895 = vunpack.c.0.s8 %v894
      %v896 = vlaneseq
      %v897 = vshrl.u32 %v896, 7
      %v898 = vsub.s32 %v895, %v897
      %v899 = vrot.slane %v885, %v898
      %v900 = vcombine.high %v892, %v892
      %v901 = vcombine.high %v899, %v899
      %v903 = vunpack.c.l.s4 1966171168
      %v904 = vunpack.c.0.s8 %v903
      %v905 = vlaneseq
      %v906 = vshrl.u32 %v905, 7
      %v907 = vsub.s32 %v904, %v906
      %v908 = vrot.slane %v892, %v907
      %v910 = vunpack.c.l.s4 1966171168
      %v911 = vunpack.c.0.s8 %v910
      %v912 = vlaneseq
      %v913 = vshrl.u32 %v912, 7
      %v914 = vsub.s32 %v911, %v913
      %v915 = vrot.slane %v899, %v914
      %v917 = vunpack.c.l.s4 1966171168
      %v918 = vunpack.c.0.s8 %v917
      %v919 = vlaneseq
      %v920 = vshrl.u32 %v919, 7
      %v921 = vsub.s32 %v918, %v920
      %v922 = vrot.slane %v900, %v921
      %v924 = vunpack.c.l.s4 1966171168
      %v925 = vunpack.c.0.s8 %v924
      %v926 = vlaneseq
      %v927 = vshrl.u32 %v926, 7
      %v928 = vsub.s32 %v925, %v927
      %v929 = vrot.slane %v901, %v928
      %v930 = vcombine.high %v908, %v908
      %v931 = vcombine.high %v915, %v915
      %v932 = vcombine.high %v922, %v922
      %v933 = vcombine.high %v929, %v929
      %942 = vst.msk [vmem:[#allocation3 + $0x2] sm:$0x1] %vm807, %v908
      %943 = vst.msk [vmem:[#allocation3 + $0x6] sm:$0x1] %vm807, %v922
      %944 = vst.msk [vmem:[#allocation3 + $0xa] sm:$0x1] %vm807, %v930
      %945 = vst.msk [vmem:[#allocation3 + $0xe] sm:$0x1] %vm807, %v932
      %946 = vst.msk [vmem:[#allocation3 + $0x12] sm:$0x1] %vm807, %v915
      %947 = vst.msk [vmem:[#allocation3 + $0x16] sm:$0x1] %vm807, %v929
      %948 = vst.msk [vmem:[#allocation3 + $0x1a] sm:$0x1] %vm807, %v931
      %949 = vst.msk [vmem:[#allocation3 + $0x1e] sm:$0x1] %vm807, %v933
      %v950 = vld [vmem:[%s659] sm:$0xff]
      %v952 = vcombine.high %v950, %v950
      %v954 = vunpack.c.l.s4 1966171168
      %v955 = vunpack.c.0.s8 %v954
      %v956 = vlaneseq
      %v957 = vshrl.u32 %v956, 7
      %v958 = vsub.s32 %v955, %v957
      %v959 = vrot.slane %v950, %v958
      %v961 = vunpack.c.l.s4 1966171168
      %v962 = vunpack.c.0.s8 %v961
      %v963 = vlaneseq
      %v964 = vshrl.u32 %v963, 7
      %v965 = vsub.s32 %v962, %v964
      %v966 = vrot.slane %v952, %v965
      %v967 = vcombine.high %v959, %v959
      %v968 = vcombine.high %v966, %v966
      %v970 = vunpack.c.l.s4 1966171168
      %v971 = vunpack.c.0.s8 %v970
      %v972 = vlaneseq
      %v973 = vshrl.u32 %v972, 7
      %v974 = vsub.s32 %v971, %v973
      %v975 = vrot.slane %v959, %v974
      %v977 = vunpack.c.l.s4 1966171168
      %v978 = vunpack.c.0.s8 %v977
      %v979 = vlaneseq
      %v980 = vshrl.u32 %v979, 7
      %v981 = vsub.s32 %v978, %v980
      %v982 = vrot.slane %v966, %v981
      %v984 = vunpack.c.l.s4 1966171168
      %v985 = vunpack.c.0.s8 %v984
      %v986 = vlaneseq
      %v987 = vshrl.u32 %v986, 7
      %v988 = vsub.s32 %v985, %v987
      %v989 = vrot.slane %v967, %v988
      %v991 = vunpack.c.l.s4 1966171168
      %v992 = vunpack.c.0.s8 %v991
      %v993 = vlaneseq
      %v994 = vshrl.u32 %v993, 7
      %v995 = vsub.s32 %v992, %v994
      %v996 = vrot.slane %v968, %v995
      %v997 = vcombine.high %v975, %v975
      %v998 = vcombine.high %v982, %v982
      %v999 = vcombine.high %v989, %v989
      %v1000 = vcombine.high %v996, %v996
      %1009 = vst.msk [vmem:[#allocation3 + $0x3] sm:$0x1] %vm807, %v975
      %1010 = vst.msk [vmem:[#allocation3 + $0x7] sm:$0x1] %vm807, %v989
      %1011 = vst.msk [vmem:[#allocation3 + $0xb] sm:$0x1] %vm807, %v997
      %1012 = vst.msk [vmem:[#allocation3 + $0xf] sm:$0x1] %vm807, %v999
      %1013 = vst.msk [vmem:[#allocation3 + $0x13] sm:$0x1] %vm807, %v982
      %1014 = vst.msk [vmem:[#allocation3 + $0x17] sm:$0x1] %vm807, %v996
      %1015 = vst.msk [vmem:[#allocation3 + $0x1b] sm:$0x1] %vm807, %v998
      %1016 = vst.msk [vmem:[#allocation3 + $0x1f] sm:$0x1] %vm807, %v1000
    $region25: #{sparse_arch_forward.1} parent=1 // pred_fallthru
      _
    // Predicated region
    $region26: #{sparse_arch_forward.1} parent=1 // pred_check
      _
    $region27: #{sparse_arch_forward.1} parent=1 // pred_check_branch
      %1018 = sbr.rel (0) target = $region29
    $region28: #{sparse_arch_forward.1} parent=1 // pred_region
      %s1020 = ssub.s32 512, 512
      %1021 = vsyncadd [#allocation4], %s1020
      %s1022 = sshll.u32 [#allocation3], 4
      %s1023 = int_to_ptr.vmem [resolvable:$true] %s1022
      %1028 = dma.vmem_to_hbm [thread:$0]  %s1023, 512, %s4, [#allocation4], 64, 64, 4
    $region29: #{sparse_arch_forward.1} parent=1 // pred_fallthru
      _
    // Predicated region
    $region30: #{sparse_arch_forward.1} parent=1 // pred_check
      _
    $region31: #{sparse_arch_forward.1} parent=1 // pred_check_branch
      %1030 = sbr.rel (0) target = $region33
    $region32: #{sparse_arch_forward.1} parent=1 // pred_region
      %1031 = dma.done [#allocation4], 512
    $region33: #{sparse_arch_forward.1} parent=1 // pred_fallthru
      _
    %1032 = vsyncpa [#allocation4], 1

</llo_original>
